<compile_context>
chip_gen: v7x
topology: tpu7x:2x2x1
jax: 0.10.0
libtpu: 0.0.40
codegen_flags: <defaults>
</compile_context>

<pallas_src>
import functools

import jax
import jax.numpy as jnp
from jax.experimental import pallas as pl
from jax.experimental.pallas import tpu as pltpu

_NORM_EPS = 1e-12   # F.normalize eps (clamp on the L2 norm)
_COS_EPS = 1e-8     # F.cosine_similarity eps (clamp on the norm product)


def _round_up(x, m):
    return (x + m - 1) // m * m


def _contrastive_loss_kernel(x_ref, pos_ref, negt_ref, out_ref,
                             xn_ref, sim_ref, acc_ref, *, pad_cols):
    """Grid = (bn_tiles, cn_tiles); cn (reduction) axis last.

    x_ref, pos_ref : (TM, d)  input tiles (resident across the cn axis)
    negt_ref       : (d, TN)  pre-normalized, pre-transposed negative tile
    out_ref        : (TM, 1)  per-sample loss  log(sum_j exp(cos)) - sim
    xn_ref         : (TM, d)  scratch: normalized x (matmul-operand dtype)
    sim_ref        : (TM, 1)  scratch: cos(x, positive)
    acc_ref        : (TM, 1)  scratch: running sum_j exp(cos(x, neg_j))
    """
    j = pl.program_id(1)

    @pl.when(j == 0)
    def _init():
        x = x_ref[...].astype(jnp.float32)        # (TM, d)
        p = pos_ref[...].astype(jnp.float32)      # (TM, d)
        # F.normalize: v / max(||v||, 1e-12) == v * rsqrt(max(||v||^2, 1e-24)).
        # rsqrt goes to the EUP slot instead of a VALU sqrt + divide chain.
        inv_x = jax.lax.rsqrt(
            jnp.maximum(jnp.sum(x * x, axis=1, keepdims=True),
                        jnp.float32(_NORM_EPS * _NORM_EPS)))
        inv_p = jax.lax.rsqrt(
            jnp.maximum(jnp.sum(p * p, axis=1, keepdims=True),
                        jnp.float32(_NORM_EPS * _NORM_EPS)))
        xn = x * inv_x
        pn = p * inv_p
        # cosine of unit (or zero) vectors is just the dot product.
        sim_ref[...] = jnp.sum(xn * pn, axis=1, keepdims=True)
        xn_ref[...] = xn.astype(xn_ref.dtype)
        acc_ref[...] = jnp.zeros_like(acc_ref)

    # (TM, d) @ (d, TN) on the MXU.  The negative bank is already L2-normalized
    # so this single matmul IS the cosine matrix -- no per-element divide.
    scores = jnp.dot(xn_ref[...], negt_ref[...],
                     preferred_element_type=jnp.float32)       # (TM, TN)
    acc_ref[...] += jnp.sum(jnp.exp(scores), axis=1, keepdims=True)

    @pl.when(j == pl.num_programs(1) - 1)
    def _finalize():
        denom = acc_ref[...]
        if pad_cols:  # zero-padded negative columns each contributed exp(0)=1
            denom = denom - jnp.float32(pad_cols)
        # p_i = exp(sim_i) / denom_i ;  -log(p_i) = log(denom_i) - sim_i
        out_ref[...] = jnp.log(denom) - sim_ref[...]


def contrastive_loss(x, positive, negative, *,
                     tm=256, tn=512, use_bf16_matmul=True):
    """Pallas forward of ContrastiveLoss.

    x: (bn, d), positive: (bn, d), negative: (cn, d) -> scalar loss.
    Default tm/tn suit v6e/v7x; on v5e prefer tm=tn=128..256.
    """
    bn, d = x.shape
    cn, dn = negative.shape
    assert dn == d and positive.shape == (bn, d)

    op_dtype = jnp.bfloat16 if use_bf16_matmul else jnp.float32

    # ---- one-time layout plumbing (outside the hot loop) -------------------
    # Pre-normalize the negative bank (eps clamp matches cosine_similarity's,
    # since ||normalize(x)|| == 1) and lay it out as (d, cn): the kernel matmul
    # then contracts the standard axis (no XLU transpose) and the (TM, TN)
    # score tile stays lane-dense.
    neg = negative.astype(jnp.float32)
    inv_n = jax.lax.rsqrt(
        jnp.maximum(jnp.sum(neg * neg, axis=1, keepdims=True),
                    jnp.float32(_COS_EPS * _COS_EPS)))
    negt = (neg * inv_n).T.astype(op_dtype)                    # (d, cn)

    # ---- tiling / padding ---------------------------------------------------
    TM = min(tm, _round_up(bn, 8))          # multiple of 8 (sublane)
    TN = min(tn, _round_up(cn, 128))        # multiple of 128 (lane-dense)
    bn_pad = _round_up(bn, TM)
    cn_pad = _round_up(cn, TN)
    pad_rows = bn_pad - bn
    pad_cols = cn_pad - cn

    if pad_rows:
        x = jnp.pad(x, ((0, pad_rows), (0, 0)))
        positive = jnp.pad(positive, ((0, pad_rows), (0, 0)))
    if pad_cols:
        negt = jnp.pad(negt, ((0, 0), (0, pad_cols)))

    grid = (bn_pad // TM, cn_pad // TN)

    # ---- VMEM budget (double-buffered inputs + scratch) ---------------------
    in_bytes = x.dtype.itemsize
    op_bytes = jnp.dtype(op_dtype).itemsize
    est_vmem = (2 * (2 * TM * d * in_bytes + d * TN * op_bytes)   # dbl-buf ins
                + 2 * TM * 4                                      # output
                + TM * d * op_bytes + 2 * TM * 4                  # scratch
                + (2 << 20))
    vmem_limit = None if est_vmem <= (32 << 20) else min(est_vmem, 96 << 20)

    cost = pl.CostEstimate(
        flops=2 * bn_pad * cn_pad * d + 8 * bn_pad * d,
        transcendentals=bn_pad * cn_pad + 3 * bn_pad,
        bytes_accessed=(2 * bn_pad * d * in_bytes
                        + grid[0] * cn_pad * d * op_bytes
                        + bn_pad * 4),
    )

    kernel = functools.partial(_contrastive_loss_kernel, pad_cols=pad_cols)

    per_sample = pl.pallas_call(
        kernel,
        out_shape=jax.ShapeDtypeStruct((bn_pad, 1), jnp.float32),
        grid_spec=pltpu.PrefetchScalarGridSpec(
            num_scalar_prefetch=0,
            grid=grid,
            in_specs=[
                pl.BlockSpec((TM, d), lambda i, j: (i, 0)),   # x tile
                pl.BlockSpec((TM, d), lambda i, j: (i, 0)),   # positive tile
                pl.BlockSpec((d, TN), lambda i, j: (0, j)),   # neg^T tile
            ],
            out_specs=pl.BlockSpec((TM, 1), lambda i, j: (i, 0)),
            scratch_shapes=[
                pltpu.VMEM((TM, d), op_dtype),     # normalized x (MXU operand)
                pltpu.VMEM((TM, 1), jnp.float32),  # sim
                pltpu.VMEM((TM, 1), jnp.float32),  # running exp-sum
            ]),
        compiler_params=pltpu.CompilerParams(
            dimension_semantics=("parallel", "arbitrary"),
            vmem_limit_bytes=vmem_limit),
        cost_estimate=cost,
    )(x, positive, negt)

    # Final tiny reduction (drop padded rows) outside the kernel.
    return jnp.sum(per_sample[:bn, 0]) / jnp.float32(bn)


def _reference_loss(x, positive, negative):
    """Pure-JAX reference mirroring the PyTorch forward."""
    NORM_EPS, COS_EPS = 1e-12, 1e-8
    xn = x / jnp.maximum(jnp.linalg.norm(x, axis=1, keepdims=True), NORM_EPS)
    pn = positive / jnp.maximum(
        jnp.linalg.norm(positive, axis=1, keepdims=True), NORM_EPS)
    sim = jnp.sum(xn * pn, axis=1) / jnp.maximum(
        jnp.linalg.norm(xn, axis=1) * jnp.linalg.norm(pn, axis=1), COS_EPS)
    dots = xn @ negative.T
    denom_norms = jnp.maximum(
        jnp.linalg.norm(xn, axis=1, keepdims=True)
        * jnp.linalg.norm(negative, axis=1)[None, :], COS_EPS)
    neg_sim = dots / denom_norms
    p = jnp.exp(sim) / jnp.sum(jnp.exp(neg_sim), axis=1)
    return -jnp.sum(jnp.log(p)) / x.shape[0]


if __name__ == "__main__":
    key = jax.random.PRNGKey(0)
    k1, k2, k3 = jax.random.split(key, 3)

    bn, d, cn = 8, 32, 8  # small synthetic shapes
    x = jax.random.normal(k1, (bn, d), dtype=jnp.float32)
    positive = jax.random.normal(k2, (bn, d), dtype=jnp.float32)
    # "negative" bank is a module parameter in PyTorch; init deterministically.
    negative = jax.random.normal(k3, (cn, d), dtype=jnp.float32)

    ref = _reference_loss(x, positive, negative)

    # Exact-math path (f32 MXU operands): tight tolerance vs the reference.
    loss_f32 = contrastive_loss(x, positive, negative, use_bf16_matmul=False)
    jax.block_until_ready(loss_f32)
    assert jnp.allclose(loss_f32, ref, rtol=1e-5, atol=1e-5), (loss_f32, ref)

    # Fast path (bf16 MXU operands, f32 accumulation): looser tolerance.
    loss_bf16 = contrastive_loss(x, positive, negative, use_bf16_matmul=True)
    jax.block_until_ready(loss_bf16)
    assert jnp.allclose(loss_bf16, ref, rtol=1e-2, atol=1e-2), (loss_bf16, ref)

    # Ragged shapes exercise the row / lane-dense column padding paths.
    bn2, d2, cn2 = 10, 48, 20
    x2 = jax.random.normal(k1, (bn2, d2), dtype=jnp.float32)
    p2 = jax.random.normal(k2, (bn2, d2), dtype=jnp.float32)
    n2 = jax.random.normal(k3, (cn2, d2), dtype=jnp.float32)
    loss2 = contrastive_loss(x2, p2, n2, use_bf16_matmul=False)
    jax.block_until_ready(loss2)
    ref2 = _reference_loss(x2, p2, n2)
    assert jnp.allclose(loss2, ref2, rtol=1e-5, atol=1e-5), (loss2, ref2)

    print("KERNEL_OK")
</pallas_src>

<mosaic_0001>
module attributes {stable_mosaic.version = 11 : i64} {
  func.func @_contrastive_loss_kernel(%arg0: i32, %arg1: i32, %arg2: memref<8x32xf32, #tpu.memory_space<vmem>>, %arg3: memref<8x32xf32, #tpu.memory_space<vmem>>, %arg4: memref<32x128xf32, #tpu.memory_space<vmem>>, %arg5: memref<8x1xf32, #tpu.memory_space<vmem>>, %arg6: memref<8x32xf32, #tpu.memory_space<vmem>>, %arg7: memref<8x1xf32, #tpu.memory_space<vmem>>, %arg8: memref<8x1xf32, #tpu.memory_space<vmem>>) attributes {dimension_semantics = [#tpu.dimension_semantics<parallel>, #tpu.dimension_semantics<arbitrary>], iteration_bounds = array<i64: 1, 1>, scalar_prefetch = 0 : i64, scratch_operands = 3 : i64, tpu.core_type = #tpu.core_type<tc>, window_params = [{transform_indices = @transform_0, window_bounds = array<i64: 8, 32>}, {transform_indices = @transform_1, window_bounds = array<i64: 8, 32>}, {transform_indices = @transform_2, window_bounds = array<i64: 32, 128>}, {transform_indices = @transform_3, window_bounds = array<i64: 8, 1>}]} {
    %c0_i32 = arith.constant 0 : i32
    %0 = arith.cmpi eq, %arg1, %c0_i32 : i32
    %1 = arith.extui %0 : i1 to i32
    %c0_i32_0 = arith.constant 0 : i32
    %2 = arith.cmpi ne, %1, %c0_i32_0 : i32
    scf.if %2 {
      %c0_11 = arith.constant 0 : index
      %c0_12 = arith.constant 0 : index
      %15 = vector.load %arg2[%c0_11, %c0_12] : memref<8x32xf32, #tpu.memory_space<vmem>>, vector<8x32xf32>
      %c0_13 = arith.constant 0 : index
      %c0_14 = arith.constant 0 : index
      %16 = vector.load %arg3[%c0_13, %c0_14] : memref<8x32xf32, #tpu.memory_space<vmem>>, vector<8x32xf32>
      %17 = arith.mulf %15, %15 : vector<8x32xf32>
      %cst_15 = arith.constant dense<0.000000e+00> : vector<8xf32>
      %18 = vector.multi_reduction <add>, %17, %cst_15 [1] : vector<8x32xf32> to vector<8xf32>
      %19 = vector.shape_cast %18 : vector<8xf32> to vector<8x1xf32>
      %cst_16 = arith.constant 1.000000e-24 : f32
      %20 = vector.broadcast %cst_16 : f32 to vector<8x1xf32>
      %21 = arith.maximumf %19, %20 : vector<8x1xf32>
      %22 = math.rsqrt %21 : vector<8x1xf32>
      %23 = arith.mulf %16, %16 : vector<8x32xf32>
      %cst_17 = arith.constant dense<0.000000e+00> : vector<8xf32>
      %24 = vector.multi_reduction <add>, %23, %cst_17 [1] : vector<8x32xf32> to vector<8xf32>
      %25 = vector.shape_cast %24 : vector<8xf32> to vector<8x1xf32>
      %cst_18 = arith.constant 1.000000e-24 : f32
      %26 = vector.broadcast %cst_18 : f32 to vector<8x1xf32>
      %27 = arith.maximumf %25, %26 : vector<8x1xf32>
      %28 = math.rsqrt %27 : vector<8x1xf32>
      %29 = vector.broadcast %22 : vector<8x1xf32> to vector<8x32xf32>
      %30 = arith.mulf %15, %29 : vector<8x32xf32>
      %31 = vector.broadcast %28 : vector<8x1xf32> to vector<8x32xf32>
      %32 = arith.mulf %16, %31 : vector<8x32xf32>
      %33 = arith.mulf %30, %32 : vector<8x32xf32>
      %cst_19 = arith.constant dense<0.000000e+00> : vector<8xf32>
      %34 = vector.multi_reduction <add>, %33, %cst_19 [1] : vector<8x32xf32> to vector<8xf32>
      %35 = vector.shape_cast %34 : vector<8xf32> to vector<8x1xf32>
      %c0_20 = arith.constant 0 : index
      %c0_21 = arith.constant 0 : index
      %36 = vector.load %arg7[%c0_20, %c0_21] : memref<8x1xf32, #tpu.memory_space<vmem>>, vector<8x1xf32>
      tpu.vector_store %arg7[%c0_20, %c0_21], %35 {strides = array<i32>} : memref<8x1xf32, #tpu.memory_space<vmem>>, vector<8x1xf32>,
      %c0_22 = arith.constant 0 : index
      %c0_23 = arith.constant 0 : index
      %37 = vector.load %arg6[%c0_22, %c0_23] : memref<8x32xf32, #tpu.memory_space<vmem>>, vector<8x32xf32>
      tpu.vector_store %arg6[%c0_22, %c0_23], %30 {strides = array<i32>} : memref<8x32xf32, #tpu.memory_space<vmem>>, vector<8x32xf32>,
      %cst_24 = arith.constant 0.000000e+00 : f32
      %38 = vector.broadcast %cst_24 : f32 to vector<8x1xf32>
      %c0_25 = arith.constant 0 : index
      %c0_26 = arith.constant 0 : index
      %39 = vector.load %arg8[%c0_25, %c0_26] : memref<8x1xf32, #tpu.memory_space<vmem>>, vector<8x1xf32>
      tpu.vector_store %arg8[%c0_25, %c0_26], %38 {strides = array<i32>} : memref<8x1xf32, #tpu.memory_space<vmem>>, vector<8x1xf32>,
    } else {
    }
    %c0 = arith.constant 0 : index
    %c0_1 = arith.constant 0 : index
    %3 = vector.load %arg6[%c0, %c0_1] : memref<8x32xf32, #tpu.memory_space<vmem>>, vector<8x32xf32>
    %c0_2 = arith.constant 0 : index
    %c0_3 = arith.constant 0 : index
    %4 = vector.load %arg4[%c0_2, %c0_3] : memref<32x128xf32, #tpu.memory_space<vmem>>, vector<32x128xf32>
    %cst = arith.constant dense<0.000000e+00> : vector<8x128xf32>
    %5 = tpu.matmul %3, %4, %cst {dimension_numbers = #tpu.dot_dimension_numbers<[1], [0], [0], [1], [0, 0, 1, 1], [], []>} : vector<8x32xf32>, vector<32x128xf32>, vector<8x128xf32> -> vector<8x128xf32>
    %c0_4 = arith.constant 0 : index
    %c0_5 = arith.constant 0 : index
    %6 = vector.load %arg8[%c0_4, %c0_5] : memref<8x1xf32, #tpu.memory_space<vmem>>, vector<8x1xf32>
    %7 = math.exp %5 : vector<8x128xf32>
    %cst_6 = arith.constant dense<0.000000e+00> : vector<8xf32>
    %8 = vector.multi_reduction <add>, %7, %cst_6 [1] : vector<8x128xf32> to vector<8xf32>
    %9 = vector.shape_cast %8 : vector<8xf32> to vector<8x1xf32>
    %10 = arith.addf %6, %9 : vector<8x1xf32>
    %c0_7 = arith.constant 0 : index
    %c0_8 = arith.constant 0 : index
    %11 = vector.load %arg8[%c0_7, %c0_8] : memref<8x1xf32, #tpu.memory_space<vmem>>, vector<8x1xf32>
    tpu.vector_store %arg8[%c0_7, %c0_8], %10 {strides = array<i32>} : memref<8x1xf32, #tpu.memory_space<vmem>>, vector<8x1xf32>,
    %c0_i32_9 = arith.constant 0 : i32
    %12 = arith.cmpi eq, %arg1, %c0_i32_9 : i32
    %13 = arith.extui %12 : i1 to i32
    %c0_i32_10 = arith.constant 0 : i32
    %14 = arith.cmpi ne, %13, %c0_i32_10 : i32
    scf.if %14 {
      %c0_11 = arith.constant 0 : index
      %c0_12 = arith.constant 0 : index
      %15 = vector.load %arg8[%c0_11, %c0_12] : memref<8x1xf32, #tpu.memory_space<vmem>>, vector<8x1xf32>
      %cst_13 = arith.constant 1.200000e+02 : f32
      %16 = vector.broadcast %cst_13 : f32 to vector<8x1xf32>
      %17 = arith.subf %15, %16 : vector<8x1xf32>
      %18 = math.log %17 : vector<8x1xf32>
      %c0_14 = arith.constant 0 : index
      %c0_15 = arith.constant 0 : index
      %19 = vector.load %arg7[%c0_14, %c0_15] : memref<8x1xf32, #tpu.memory_space<vmem>>, vector<8x1xf32>
      %20 = arith.subf %18, %19 : vector<8x1xf32>
      %c0_16 = arith.constant 0 : index
      %c0_17 = arith.constant 0 : index
      %21 = vector.load %arg5[%c0_16, %c0_17] : memref<8x1xf32, #tpu.memory_space<vmem>>, vector<8x1xf32>
      tpu.vector_store %arg5[%c0_16, %c0_17], %20 {strides = array<i32>} : memref<8x1xf32, #tpu.memory_space<vmem>>, vector<8x1xf32>,
    } else {
    }
    return
  }
  func.func @transform_0(%arg0: i32, %arg1: i32) -> (i32, i32) {
    %c0_i32 = arith.constant 0 : i32
    %c0_i32_0 = arith.constant 0 : i32
    return %arg0, %c0_i32 : i32, i32
  }
  func.func @transform_1(%arg0: i32, %arg1: i32) -> (i32, i32) {
    %c0_i32 = arith.constant 0 : i32
    %c0_i32_0 = arith.constant 0 : i32
    return %arg0, %c0_i32 : i32, i32
  }
  func.func @transform_2(%arg0: i32, %arg1: i32) -> (i32, i32) {
    %c0_i32 = arith.constant 0 : i32
    %c0_i32_0 = arith.constant 0 : i32
    return %c0_i32, %arg1 : i32, i32
  }
  func.func @transform_3(%arg0: i32, %arg1: i32) -> (i32, i32) {
    %c0_i32 = arith.constant 0 : i32
    %c0_i32_0 = arith.constant 0 : i32
    return %arg0, %c0_i32 : i32, i32
  }
}

</mosaic_0001>

<llo_original>
// kernel: tpu_custom_call.1
$region0: #{tpu_custom_call.1}
  #allocation0 [shape = 'u32[]', space=smem, size = 0x4, offset = 0x4, fixed_abs, tag = 'smem constant byte address 0x4 - core index']
  #allocation1 [shape = 'u32[144,128]{1,0:T(1,128)}', space=vmem, size = 0x12000, scoped, tag = 'internal scratch']
  #allocation2 [shape = 'f32[8,32]{1,0:T(8,128)}', space=vmem, size = 0x1000, scoped, tag = 'scratch operand']
  #allocation3 [shape = 'f32[8,1]{1,0:T(8,128)}', space=vmem, size = 0x1000, scoped, tag = 'scratch operand']
  #allocation4 [shape = 'f32[8,1]{1,0:T(8,128)}', space=vmem, size = 0x1000, scoped, tag = 'scratch operand']
  %s0 = inlined_call_operand.hbm [shape: f32[8,32], index: 0, kind: input, shape index: {}]
  %s1 = inlined_call_operand.hbm [shape: f32[8,32], index: 1, kind: input, shape index: {}]
  %s2 = inlined_call_operand.hbm [shape: f32[32,128], index: 2, kind: input, shape index: {}]
  %s3 = inlined_call_operand.vmem [shape: f32[8,1], index: 3, kind: output, shape index: {}]
  %s4 = sld [smem:[#allocation0]]
  $region42: #{tpu_custom_call.1} parent=0
    _
  %s6 = ssub.s32 1, %s4
  %s7 = scalar_select 0, %s6, %s4
  $region1: #{tpu_custom_call.1} parent=0
    #allocation5 [shape = 'u8[4096]{0}', space=vmem, size = 0x1000, scoped, tag = 'input window, operand 0, single buffered']
    #allocation6 [shape = 's32[1]{0}', space=sflag, size = 0x4, scoped, tag = 'scoped memory for tpu_custom_call.1']
    #allocation7 [shape = 'u8[4096]{0}', space=vmem, size = 0x1000, scoped, tag = 'input window, operand 1, single buffered']
    #allocation8 [shape = 's32[1]{0}', space=sflag, size = 0x4, scoped, tag = 'scoped memory for tpu_custom_call.1']
    #allocation9 [shape = 'u8[16384]{0}', space=vmem, size = 0x4000, scoped, tag = 'input window, operand 2, single buffered']
    %8 = vsyncpa [#allocation6], 0
    %9 = vsyncpa [#allocation8], 0
    // Predicated region
    $region2: #{tpu_custom_call.1} parent=1 // pred_check
      _
    $region3: #{tpu_custom_call.1} parent=1 // pred_check_branch
      %11 = sbr.rel (0) target = $region5
    $region4: #{tpu_custom_call.1} parent=1 // pred_region
      %s13 = ssub.s32 128, 128
      %14 = vsyncadd [#allocation6], %s13
      %s16 = sshll.u32 [#allocation5], 4
      %s17 = int_to_ptr.vmem [resolvable:$true] %s16
      %19 = dma.hbm_to_vmem [thread:$0]  %s0, 128, %s17, [#allocation6]
    $region5: #{tpu_custom_call.1} parent=1 // pred_fallthru
      _
    // Predicated region
    $region6: #{tpu_custom_call.1} parent=1 // pred_check
      _
    $region7: #{tpu_custom_call.1} parent=1 // pred_check_branch
      %21 = sbr.rel (0) target = $region9
    $region8: #{tpu_custom_call.1} parent=1 // pred_region
      %s23 = ssub.s32 128, 128
      %24 = vsyncadd [#allocation8], %s23
      %s26 = sshll.u32 [#allocation7], 4
      %s27 = int_to_ptr.vmem [resolvable:$true] %s26
      %29 = dma.hbm_to_vmem [thread:$0]  %s1, 128, %s27, [#allocation8]
    $region9: #{tpu_custom_call.1} parent=1 // pred_fallthru
      _
    // Predicated region
    $region10: #{tpu_custom_call.1} parent=1 // pred_check
      _
    $region11: #{tpu_custom_call.1} parent=1 // pred_check_branch
      %31 = sbr.rel (0) target = $region13
    $region12: #{tpu_custom_call.1} parent=1 // pred_region
      %s33 = ssub.s32 512, 512
      %34 = vsyncadd [#allocation8], %s33
      %s35 = sshll.u32 [#allocation9], 4
      %s36 = int_to_ptr.vmem [resolvable:$true] %s35
      %41 = dma.hbm_to_vmem [thread:$0]  %s2, 512, %s36, [#allocation8], 128, 128, 8
    $region13: #{tpu_custom_call.1} parent=1 // pred_fallthru
      _
    // Predicated region
    $region14: #{tpu_custom_call.1} parent=1 // pred_check
      _
    $region15: #{tpu_custom_call.1} parent=1 // pred_check_branch
      %43 = sbr.rel (0) target = $region17
    $region16: #{tpu_custom_call.1} parent=1 // pred_region
      %44 = dma.done [#allocation6], 128
    $region17: #{tpu_custom_call.1} parent=1 // pred_fallthru
      _
    // Predicated region
    $region18: #{tpu_custom_call.1} parent=1 // pred_check
      _
    $region19: #{tpu_custom_call.1} parent=1 // pred_check_branch
      %46 = sbr.rel (0) target = $region21
    $region20: #{tpu_custom_call.1} parent=1 // pred_region
      %47 = dma.done [#allocation8], 128
    $region21: #{tpu_custom_call.1} parent=1 // pred_fallthru
      _
    // Predicated region
    $region22: #{tpu_custom_call.1} parent=1 // pred_check
      _
    $region23: #{tpu_custom_call.1} parent=1 // pred_check_branch
      %49 = sbr.rel (0) target = $region25
    $region24: #{tpu_custom_call.1} parent=1 // pred_region
      %50 = dma.done [#allocation8], 512
    $region25: #{tpu_custom_call.1} parent=1 // pred_fallthru
      _
    %p51 = scmp.eq.s32.totalorder 0, 0
    // Predicated region
    $region26: #{tpu_custom_call.1} parent=1 // pred_check
      %p52 = pneg %p51
    $region27: #{tpu_custom_call.1} parent=1 // pred_check_branch
      %54 = sbr.rel (%p52) target = $region29
    $region28: #{tpu_custom_call.1} parent=1 // pred_region
      %v55 = vld [vmem:[#allocation5] sm:$0xff]
      %v56 = vld [vmem:[#allocation7] sm:$0xff]
      %v57 = vmul.f32 %v55, %v55
      %vm58 = vcmask 261120
      %v59 = vsel %vm58, %v57, 0.0
      %60 = vadd.xlane.f32.xlu0 %v59
      %v61 = vpop.xlane.xlu0 %60
      %v62 = vmax.f32 %v61, 1e-24
      %v63 = vrsqrt.pop %v62
      %v64 = vmul.f32 %v56, %v56
      %v65 = vsel %vm58, %v64, 0.0
      %66 = vadd.xlane.f32.xlu0 %v65
      %v67 = vpop.xlane.xlu0 %66
      %v68 = vmax.f32 %v67, 1e-24
      %v69 = vrsqrt.pop %v68
      %v70 = vmul.f32 %v55, %v63
      %v71 = vmul.f32 %v56, %v69
      %v72 = vmul.f32 %v70, %v71
      %v73 = vsel %vm58, %v72, 0.0
      %74 = vadd.xlane.f32.xlu0 %v73
      %v75 = vpop.xlane.xlu0 %74
      %vm76 = vcmask 7168
      %77 = vst.msk [vmem:[#allocation3] sm:$0xff] %vm76, %v75
      %78 = vst.msk [vmem:[#allocation2] sm:$0xff] %vm58, %v70
      %79 = vst.msk [vmem:[#allocation4] sm:$0xff] %vm76, 0.0
    $region29: #{tpu_custom_call.1} parent=1 // pred_fallthru
      _
    %v80 = vld [vmem:[#allocation2] sm:$0xff]
    %v81 = vld [vmem:[#allocation9] sm:$0xff]
    %v82 = vld [vmem:[#allocation9 + $0x8] sm:$0xff]
    %v83 = vld [vmem:[#allocation9 + $0x10] sm:$0xff]
    %v84 = vld [vmem:[#allocation9 + $0x18] sm:$0xff]
    %vm85 = vcmask 261120
    %v87 = vsel %vm85, %v80, 0
    %89 = vmatprep.subr.mxu0 0.0
    %90 = vmatpush1.msra.mxu0 %v81
    %91 = vmatprep.subr.mxu0 0.0
    %92 = vmatpush1.msra.mxu0 %v82
    %93 = vmatprep.subr.mxu0 0.0
    %94 = vmatpush1.msra.mxu0 %v83
    %95 = vmatprep.subr.mxu0 0.0
    %96 = vmatpush1.msra.mxu0 %v84
    %97 = vmatprep.subr.mxu0 0.0
    %98 = vmatpush1.msra.mxu0 0.0
    %99 = vmatprep.subr.mxu0 0.0
    %100 = vmatpush1.msra.mxu0 0.0
    %101 = vmatprep.subr.mxu0 0.0
    %102 = vmatpush1.msra.mxu0 0.0
    %103 = vmatprep.subr.mxu0 0.0
    %104 = vmatpush1.msra.mxu0 0.0
    %105 = vmatprep.subr.mxu0 0.0
    %106 = vmatpush1.msra.mxu0 0.0
    %107 = vmatprep.subr.mxu0 0.0
    %108 = vmatpush1.msra.mxu0 0.0
    %109 = vmatprep.subr.mxu0 0.0
    %110 = vmatpush1.msra.mxu0 0.0
    %111 = vmatprep.subr.mxu0 0.0
    %112 = vmatpush1.msra.mxu0 0.0
    %113 = vmatprep.subr.mxu0 0.0
    %114 = vmatpush1.msra.mxu0 0.0
    %115 = vmatprep.subr.mxu0 0.0
    %116 = vmatpush1.msra.mxu0 0.0
    %117 = vmatprep.subr.mxu0 0.0
    %118 = vmatpush1.msra.mxu0 0.0
    %119 = vmatprep.subr.mxu0 0.0
    %120 = vmatpush1.msra.mxu0 0.0
    %121 = vmatprep.subr.mxu0 0.0
    %122 = vmatpush1.msra.mxu0 0.0
    %123 = vmatprep.subr.mxu0 0.0
    %124 = vmatpush1.msra.mxu0 0.0
    %125 = vmatprep.subr.mxu0 0.0
    %126 = vmatpush1.msra.mxu0 0.0
    %127 = vmatprep.subr.mxu0 0.0
    %128 = vmatpush1.msra.mxu0 0.0
    %129 = vmatprep.subr.mxu0 0.0
    %130 = vmatpush1.msra.mxu0 0.0
    %131 = vmatprep.subr.mxu0 0.0
    %132 = vmatpush1.msra.mxu0 0.0
    %133 = vmatprep.subr.mxu0 0.0
    %134 = vmatpush1.msra.mxu0 0.0
    %135 = vmatprep.subr.mxu0 0.0
    %136 = vmatpush1.msra.mxu0 0.0
    %137 = vmatprep.subr.mxu0 0.0
    %138 = vmatpush1.msra.mxu0 0.0
    %139 = vmatprep.subr.mxu0 0.0
    %140 = vmatpush1.msra.mxu0 0.0
    %141 = vmatprep.subr.mxu0 0.0
    %142 = vmatpush1.msra.mxu0 0.0
    %143 = vmatprep.subr.mxu0 0.0
    %144 = vmatpush1.msra.mxu0 0.0
    %145 = vmatprep.subr.mxu0 0.0
    %146 = vmatpush1.msra.mxu0 0.0
    %147 = vmatprep.subr.mxu0 0.0
    %148 = vmatpush1.msra.mxu0 0.0
    %149 = vmatprep.subr.mxu0 0.0
    %150 = vmatpush1.msra.mxu0 0.0
    %151 = vmatprep.subr.mxu0 0.0
    %152 = vmatpush1.msra.mxu0 0.0
    %153 = vmatprep.mubr.f32.mxu0 0.0
    %154 = vmatmul.mubr.f32.gmra.mrb[0].mxu0 %v87
    %v155 = vpop.f32.mrb[0].mxu0
    %v156 = vadd.f32 0.0, %v155
    %v157 = vpop.f32.mrb[0].mxu0
    %158 = vdwg.mxu0
    %v159 = vld [vmem:[#allocation4] sm:$0xff]
    %v160 = vmul.f32 %v156, 1.442695
    %v161 = vpow.pop %v160
    %162 = vadd.xlane.f32.xlu0 %v161
    %v163 = vpop.xlane.xlu0 %162
    %v164 = vadd.f32 %v159, %v163
    %vm165 = vcmask 7168
    %166 = vst.msk [vmem:[#allocation4] sm:$0xff] %vm165, %v164
    // Predicated region
    $region30: #{tpu_custom_call.1} parent=1 // pred_check
      %p167 = pneg %p51
    $region31: #{tpu_custom_call.1} parent=1 // pred_check_branch
      %169 = sbr.rel (%p167) target = $region33
    $region32: #{tpu_custom_call.1} parent=1 // pred_region
      %v170 = vld [vmem:[#allocation4] sm:$0xff]
      %v171 = vsub.f32 %v170, 120.0
      %v172 = vlog2.pop %v171
      %v173 = vmul.f32 %v172, 0.6931472
      %v174 = vld [vmem:[#allocation3] sm:$0xff]
      %v175 = vsub.f32 %v173, %v174
      %176 = vst.msk [vmem:[%s3] sm:$0xff] %vm165, %v175
    $region33: #{tpu_custom_call.1} parent=1 // pred_fallthru
      _
    // Predicated region
    $region34: #{tpu_custom_call.1} parent=1 // pred_check
      _
    $region35: #{tpu_custom_call.1} parent=1 // pred_check_branch
      %178 = sbr.rel (0) target = $region37
    $region36: #{tpu_custom_call.1} parent=1 // pred_region
      _
    $region37: #{tpu_custom_call.1} parent=1 // pred_fallthru
      _
    // Predicated region
    $region38: #{tpu_custom_call.1} parent=1 // pred_check
      _
    $region39: #{tpu_custom_call.1} parent=1 // pred_check_branch
      %180 = sbr.rel (0) target = $region41
    $region40: #{tpu_custom_call.1} parent=1 // pred_region
      _
    $region41: #{tpu_custom_call.1} parent=1 // pred_fallthru
      _
    %181 = vsyncpa [#allocation6], 1
    %182 = vsyncpa [#allocation8], 1

</llo_original>
